<compile_context>
chip_gen: v7x
topology: tpu7x:2x2x1
jax: 0.10.0
libtpu: 0.0.40
codegen_flags: <defaults>
</compile_context>

<pallas_src>
import jax
import jax.numpy as jnp
from jax.experimental import pallas as pl
from jax.experimental.pallas import tpu as pltpu


def _local_gnn_kernel(adj_ref, xw_ref, bias_ref, o_ref):
    # adj_ref : (V, N)       graph adjacency
    # xw_ref  : (N, BT*D)    x with the Linear weight pre-applied, lane-dense:
    #                        xw[n, bt*D + e] = sum_d x[bt, n, d] * W[e, d]
    # bias_ref: (1, BT*D)    bias tiled BT times
    # o_ref   : (V, BT*D)    lane-dense output slab: out[v, bt*D + e]
    g = jnp.dot(adj_ref[...], xw_ref[...],
                preferred_element_type=jnp.float32)        # (V, BT*D) single MXU call
    y = g + bias_ref[...]                                  # broadcast over V rows
    o_ref[...] = jnp.maximum(y, 0.0).astype(o_ref.dtype)


@jax.jit
def local_gnn_forward(x, adj, weight, bias):
    """x: (B, T, N, D), adj: (V, N), weight: (D, D) [out, in], bias: (D,).

    Returns (B, T, V, D) = ReLU( einsum('vn,btnd->btvd', adj, x) @ W^T + bias ).
    """
    B, T, N, D = x.shape
    V = adj.shape[0]
    BT = B * T

    # Wrapper-side (fused under this jit): apply the Linear weight and build
    # the lane-dense operand directly in its permuted layout in one einsum.
    #   xw[n, bt*D + e] = sum_d x[bt, n, d] * W[e, d]
    xw = jnp.einsum("btnd,ed->nbte", x, weight).reshape(N, BT * D)
    bias_t = jnp.tile(bias, (BT,)).reshape(1, BT * D)

    out_flat = pl.pallas_call(
        _local_gnn_kernel,
        out_shape=jax.ShapeDtypeStruct((V, BT * D), x.dtype),
        grid_spec=pl.GridSpec(
            grid=(1,),                                        # single step: latency-bound kernel
            in_specs=[
                pl.BlockSpec((V, N), lambda i: (0, 0)),       # adj (full)
                pl.BlockSpec((N, BT * D), lambda i: (0, 0)),  # pre-weighted x (full, lane-dense)
                pl.BlockSpec((1, BT * D), lambda i: (0, 0)),  # tiled bias
            ],
            out_specs=pl.BlockSpec((V, BT * D), lambda i: (0, 0)),
        ),
    )(adj, xw, bias_t)

    # (V, BT*D) -> (B, T, V, D)   (fused into the same jit)
    return out_flat.reshape(V, BT, D).transpose(1, 0, 2).reshape(B, T, V, D)


def local_gnn_reference(x, adj, weight, bias):
    g = jnp.einsum("vn,btnd->btvd", adj, x)
    y = jnp.einsum("btvd,ed->btve", g, weight) + bias
    return jnp.maximum(y, 0.0)


if __name__ == "__main__":
    # Shapes consistent with the module:
    #   input_window T = 8, nodes N = V = 16, hidden_dim D = 32, batch B = 2
    B, T, N, D = 2, 8, 16, 32

    key = jax.random.PRNGKey(0)
    k_x, k_a, k_w, k_b = jax.random.split(key, 4)

    x = jax.random.normal(k_x, (B, T, N, D), dtype=jnp.float32)
    adj = jax.random.uniform(k_a, (N, N), dtype=jnp.float32)          # A: (V, N)
    # nn.Linear(hidden_dim, hidden_dim) params (deterministic synthetic init)
    weight = jax.random.normal(k_w, (D, D), dtype=jnp.float32) * 0.1  # (out, in)
    bias = jax.random.normal(k_b, (D,), dtype=jnp.float32) * 0.1

    out = local_gnn_forward(x, adj, weight, bias)
    out = jax.block_until_ready(out)

    ref = local_gnn_reference(x, adj, weight, bias)
    V = adj.shape[0]
    assert out.shape == (B, T, V, D)
    assert jnp.allclose(out, ref, atol=1e-4, rtol=1e-4), "mismatch vs reference"

    print("KERNEL_OK")
</pallas_src>

<mosaic_0001>
module attributes {stable_mosaic.version = 11 : i64} {
  func.func @_local_gnn_kernel(%arg0: i32, %arg1: memref<16x16xf32, #tpu.memory_space<vmem>>, %arg2: memref<16x512xf32, #tpu.memory_space<vmem>>, %arg3: memref<1x512xf32, #tpu.memory_space<vmem>>, %arg4: memref<16x512xf32, #tpu.memory_space<vmem>>) attributes {dimension_semantics = [#tpu.dimension_semantics<arbitrary>], iteration_bounds = array<i64: 1>, scalar_prefetch = 0 : i64, scratch_operands = 0 : i64, tpu.core_type = #tpu.core_type<tc>, window_params = [{pipeline_mode = #tpu.pipeline_mode<synchronous>, transform_indices = @transform_0, window_bounds = array<i64: 16, 16>}, {pipeline_mode = #tpu.pipeline_mode<synchronous>, transform_indices = @transform_1, window_bounds = array<i64: 16, 512>}, {pipeline_mode = #tpu.pipeline_mode<synchronous>, transform_indices = @transform_2, window_bounds = array<i64: 1, 512>}, {pipeline_mode = #tpu.pipeline_mode<synchronous>, transform_indices = @transform_3, window_bounds = array<i64: 16, 512>}]} {
    %c0 = arith.constant 0 : index
    %c0_0 = arith.constant 0 : index
    %0 = vector.load %arg1[%c0, %c0_0] : memref<16x16xf32, #tpu.memory_space<vmem>>, vector<16x16xf32>
    %c0_1 = arith.constant 0 : index
    %c0_2 = arith.constant 0 : index
    %1 = vector.load %arg2[%c0_1, %c0_2] : memref<16x512xf32, #tpu.memory_space<vmem>>, vector<16x512xf32>
    %cst = arith.constant dense<0.000000e+00> : vector<16x512xf32>
    %2 = tpu.matmul %0, %1, %cst {dimension_numbers = #tpu.dot_dimension_numbers<[1], [0], [0], [1], [0, 0, 1, 1], [], []>} : vector<16x16xf32>, vector<16x512xf32>, vector<16x512xf32> -> vector<16x512xf32>
    %c0_3 = arith.constant 0 : index
    %c0_4 = arith.constant 0 : index
    %3 = vector.load %arg3[%c0_3, %c0_4] : memref<1x512xf32, #tpu.memory_space<vmem>>, vector<1x512xf32>
    %4 = vector.broadcast %3 : vector<1x512xf32> to vector<16x512xf32>
    %5 = arith.addf %2, %4 : vector<16x512xf32>
    %cst_5 = arith.constant 0.000000e+00 : f32
    %6 = vector.broadcast %cst_5 : f32 to vector<16x512xf32>
    %7 = arith.maximumf %5, %6 : vector<16x512xf32>
    %c0_6 = arith.constant 0 : index
    %c0_7 = arith.constant 0 : index
    %8 = vector.load %arg4[%c0_6, %c0_7] : memref<16x512xf32, #tpu.memory_space<vmem>>, vector<16x512xf32>
    tpu.vector_store %arg4[%c0_6, %c0_7], %7 {strides = array<i32>} : memref<16x512xf32, #tpu.memory_space<vmem>>, vector<16x512xf32>,
    return
  }
  func.func @transform_0(%arg0: i32) -> (i32, i32) {
    %c0_i32 = arith.constant 0 : i32
    %c0_i32_0 = arith.constant 0 : i32
    %c0_i32_1 = arith.constant 0 : i32
    return %c0_i32, %c0_i32_0 : i32, i32
  }
  func.func @transform_1(%arg0: i32) -> (i32, i32) {
    %c0_i32 = arith.constant 0 : i32
    %c0_i32_0 = arith.constant 0 : i32
    %c0_i32_1 = arith.constant 0 : i32
    return %c0_i32, %c0_i32_0 : i32, i32
  }
  func.func @transform_2(%arg0: i32) -> (i32, i32) {
    %c0_i32 = arith.constant 0 : i32
    %c0_i32_0 = arith.constant 0 : i32
    %c0_i32_1 = arith.constant 0 : i32
    return %c0_i32, %c0_i32_0 : i32, i32
  }
  func.func @transform_3(%arg0: i32) -> (i32, i32) {
    %c0_i32 = arith.constant 0 : i32
    %c0_i32_0 = arith.constant 0 : i32
    %c0_i32_1 = arith.constant 0 : i32
    return %c0_i32, %c0_i32_0 : i32, i32
  }
}

</mosaic_0001>

<llo_original>
// kernel: tile.8
$region0: #{tile.8}
  #allocation0 [shape = 's32[1]{0}', space=sflag, size = 0x4, scoped, tag = 'scoped memory for tile.8']
  %s0 = inlined_call_operand.vmem [shape: f32[32], index: 0, kind: input, shape index: {}]
  %s1 = inlined_call_operand.vmem [shape: f32[16,32], index: 1, kind: output, shape index: {}]
  // Predicated region
  $region2: #{tile.8} parent=0 // pred_check
    _
  $region3: #{tile.8} parent=0 // pred_check_branch
    %3 = sbr.rel (0) target = $region5
  $region4: #{tile.8} parent=0 // pred_region
    _
  $region5: #{tile.8} parent=0 // pred_fallthru
    _
  %v4 = vld [vmem:[%s0] ss:$0 sm:$0xff]
  %5 = vst [vmem:[%s1] sm:$0xff] %v4
  %s6 = scalar_lea.vmem %s1, 8
  %7 = vst [vmem:[%s6] sm:$0xff] %v4

// kernel: tile.9
$region0: #{tile.9}
  %s0 = inlined_call_operand.vmem [shape: f32[16,32], index: 0, kind: input, shape index: {}]
  %s1 = inlined_call_operand.vmem [shape: f32[1,512], index: 1, kind: output, shape index: {}]
  $region1: #{tile.9} parent=0
    #allocation0 [shape = 'u8[16384]{0}', space=vmem, size = 0x4000, scoped, tag = 'scoped mem for output reshape']
    %v2 = vld [vmem:[%s0] ss:$4 sm:$0xf]
    %vm3 = vcmask 261120
    %4 = vst.msk [vmem:[#allocation0] ss:$8 sm:$0xf] %vm3, %v2
    %s5 = scalar_lea.vmem %s0, 3
    %v6 = vld [vmem:[%s5] ss:$4 sm:$0xf]
    %7 = vrot.lane.b32.xlu0 %v6, 96
    %v8 = vpop.permute.xlu0 %7
    %vm9 = vcmask 1048320
    %10 = vst.msk [vmem:[#allocation0] ss:$8 sm:$0xf] %vm9, %v8
    %s11 = scalar_lea.vmem %s0, 2
    %v12 = vld [vmem:[%s11] ss:$4 sm:$0xf]
    %13 = vrot.lane.b32.xlu0 %v12, 64
    %v14 = vpop.permute.xlu0 %13
    %vm15 = vcmask 785920
    %16 = vst.msk [vmem:[#allocation0] ss:$8 sm:$0xf] %vm15, %v14
    %s17 = scalar_lea.vmem %s0, 1
    %v18 = vld [vmem:[%s17] ss:$4 sm:$0xf]
    %19 = vrot.lane.b32.xlu0 %v18, 32
    %v20 = vpop.permute.xlu0 %19
    %vm21 = vcmask 523520
    %22 = vst.msk [vmem:[#allocation0] ss:$8 sm:$0xf] %vm21, %v20
    %s24 = sshllo.u32 0, 1
    %v26 = vld [vmem:[#allocation0] sm:%s24]
    %s27 = sshllo.u32 0, 1
    %28 = vst [vmem:[%s1] sm:%s27] %v26
    %s29 = scalar_lea.vmem [#allocation0], 8
    %v30 = vld [vmem:[%s29] sm:%s24]
    %s31 = sshllo.u32 0, 1
    %s32 = scalar_lea.vmem %s1, 1
    %33 = vst [vmem:[%s32] sm:%s31] %v30
    %s34 = scalar_lea.vmem [#allocation0], 16
    %v35 = vld [vmem:[%s34] sm:%s24]
    %s36 = sshllo.u32 0, 1
    %s37 = smul.addr 1, 2
    %s38 = scalar_lea.vmem %s1, %s37
    %39 = vst [vmem:[%s38] sm:%s36] %v35
    %s40 = scalar_lea.vmem [#allocation0], 24
    %v41 = vld [vmem:[%s40] sm:%s24]
    %s42 = sshllo.u32 0, 1
    %s43 = smul.addr 1, 3
    %s44 = scalar_lea.vmem %s1, %s43
    %45 = vst [vmem:[%s44] sm:%s42] %v41

// kernel: local_gnn_forward.1
$region0: #{local_gnn_forward.1}
  #allocation0 [shape = 'u32[]', space=smem, size = 0x4, offset = 0x4, fixed_abs, tag = 'smem constant byte address 0x4 - core index']
  #allocation1 [shape = 'u32[144,128]{1,0:T(1,128)}', space=vmem, size = 0x12000, scoped, tag = 'internal scratch']
  %s0 = inlined_call_operand.vmem [shape: f32[16,16], index: 0, kind: input, shape index: {}]
  %s1 = inlined_call_operand.vmem [shape: f32[16,512], index: 1, kind: input, shape index: {}]
  %s2 = inlined_call_operand.vmem [shape: f32[1,512], index: 2, kind: input, shape index: {}]
  %s3 = inlined_call_operand.vmem [shape: f32[16,512], index: 3, kind: output, shape index: {}]
  %s4 = sld [smem:[#allocation0]]
  $region22: #{local_gnn_forward.1} parent=0
    _
  %s6 = ssub.s32 1, %s4
  %s7 = scalar_select 0, %s6, %s4
  // Predicated region
  $region2: #{local_gnn_forward.1} parent=0 // pred_check
    _
  $region3: #{local_gnn_forward.1} parent=0 // pred_check_branch
    %9 = sbr.rel (0) target = $region5
  $region4: #{local_gnn_forward.1} parent=0 // pred_region
    _
  $region5: #{local_gnn_forward.1} parent=0 // pred_fallthru
    _
  // Predicated region
  $region6: #{local_gnn_forward.1} parent=0 // pred_check
    _
  $region7: #{local_gnn_forward.1} parent=0 // pred_check_branch
    %11 = sbr.rel (0) target = $region9
  $region8: #{local_gnn_forward.1} parent=0 // pred_region
    _
  $region9: #{local_gnn_forward.1} parent=0 // pred_fallthru
    _
  // Predicated region
  $region10: #{local_gnn_forward.1} parent=0 // pred_check
    _
  $region11: #{local_gnn_forward.1} parent=0 // pred_check_branch
    %13 = sbr.rel (0) target = $region13
  $region12: #{local_gnn_forward.1} parent=0 // pred_region
    _
  $region13: #{local_gnn_forward.1} parent=0 // pred_fallthru
    _
  %v14 = vld [vmem:[%s0] sm:$0xff]
  %v15 = vld [vmem:[%s0 + $0x8] sm:$0xff]
  %v16 = vld [vmem:[%s1] sm:$0xff]
  %v17 = vld [vmem:[%s1 + $0x8] sm:$0xff]
  %v18 = vld [vmem:[%s1 + $0x10] sm:$0xff]
  %v19 = vld [vmem:[%s1 + $0x18] sm:$0xff]
  %v20 = vld [vmem:[%s1 + $0x20] sm:$0xff]
  %v21 = vld [vmem:[%s1 + $0x28] sm:$0xff]
  %v22 = vld [vmem:[%s1 + $0x30] sm:$0xff]
  %v23 = vld [vmem:[%s1 + $0x38] sm:$0xff]
  %v24 = vld [vmem:[%s2] sm:$0xf]
  %v26 = vlaneseq
  %v27 = vshrl.u32 %v26, 7
  %v28 = vsub.s32 0, %v27
  %v29 = vrot.slane %v24, %v28
  %v30 = vlaneseq
  %v31 = vshrl.u32 %v30, 7
  %v32 = vsub.s32 1, %v31
  %v33 = vrot.slane %v24, %v32
  %v34 = vlaneseq
  %v35 = vshrl.u32 %v34, 7
  %v36 = vsub.s32 2, %v35
  %v37 = vrot.slane %v24, %v36
  %v38 = vlaneseq
  %v39 = vshrl.u32 %v38, 7
  %v40 = vsub.s32 3, %v39
  %v41 = vrot.slane %v24, %v40
  %vm46 = vcmask 130048
  %v48 = vsel %vm46, %v14, 0
  %v51 = vsel %vm46, %v15, 0
  %53 = vmatprep.subr.mxu0 %v17
  %54 = vmatpush1.msra.mxu0 %v16
  %55 = vmatprep.subr.mxu0 %v21
  %56 = vmatpush1.msra.mxu0 %v20
  %57 = vmatprep.subr.mxu0 0.0
  %58 = vmatpush1.msra.mxu0 0.0
  %59 = vmatprep.subr.mxu0 0.0
  %60 = vmatpush1.msra.mxu0 0.0
  %61 = vmatprep.subr.mxu0 0.0
  %62 = vmatpush1.msra.mxu0 0.0
  %63 = vmatprep.subr.mxu0 0.0
  %64 = vmatpush1.msra.mxu0 0.0
  %65 = vmatprep.subr.mxu0 0.0
  %66 = vmatpush1.msra.mxu0 0.0
  %67 = vmatprep.subr.mxu0 0.0
  %68 = vmatpush1.msra.mxu0 0.0
  %69 = vmatprep.subr.mxu0 0.0
  %70 = vmatpush1.msra.mxu0 0.0
  %71 = vmatprep.subr.mxu0 0.0
  %72 = vmatpush1.msra.mxu0 0.0
  %73 = vmatprep.subr.mxu0 0.0
  %74 = vmatpush1.msra.mxu0 0.0
  %75 = vmatprep.subr.mxu0 0.0
  %76 = vmatpush1.msra.mxu0 0.0
  %77 = vmatprep.subr.mxu0 0.0
  %78 = vmatpush1.msra.mxu0 0.0
  %79 = vmatprep.subr.mxu0 0.0
  %80 = vmatpush1.msra.mxu0 0.0
  %81 = vmatprep.subr.mxu0 0.0
  %82 = vmatpush1.msra.mxu0 0.0
  %83 = vmatprep.subr.mxu0 0.0
  %84 = vmatpush1.msra.mxu0 0.0
  %85 = vmatprep.subr.mxu0 0.0
  %86 = vmatpush1.msra.mxu0 0.0
  %87 = vmatprep.subr.mxu0 0.0
  %88 = vmatpush1.msra.mxu0 0.0
  %89 = vmatprep.subr.mxu0 0.0
  %90 = vmatpush1.msra.mxu0 0.0
  %91 = vmatprep.subr.mxu0 0.0
  %92 = vmatpush1.msra.mxu0 0.0
  %93 = vmatprep.subr.mxu0 0.0
  %94 = vmatpush1.msra.mxu0 0.0
  %95 = vmatprep.subr.mxu0 0.0
  %96 = vmatpush1.msra.mxu0 0.0
  %97 = vmatprep.subr.mxu0 0.0
  %98 = vmatpush1.msra.mxu0 0.0
  %99 = vmatprep.subr.mxu0 0.0
  %100 = vmatpush1.msra.mxu0 0.0
  %101 = vmatprep.subr.mxu0 0.0
  %102 = vmatpush1.msra.mxu0 0.0
  %103 = vmatprep.subr.mxu0 0.0
  %104 = vmatpush1.msra.mxu0 0.0
  %105 = vmatprep.subr.mxu0 0.0
  %106 = vmatpush1.msra.mxu0 0.0
  %107 = vmatprep.subr.mxu0 0.0
  %108 = vmatpush1.msra.mxu0 0.0
  %109 = vmatprep.subr.mxu0 0.0
  %110 = vmatpush1.msra.mxu0 0.0
  %111 = vmatprep.subr.mxu0 0.0
  %112 = vmatpush1.msra.mxu0 0.0
  %113 = vmatprep.subr.mxu0 0.0
  %114 = vmatpush1.msra.mxu0 0.0
  %115 = vmatprep.subr.mxu0 0.0
  %116 = vmatpush1.msra.mxu0 0.0
  %117 = vmatprep.mubr.f32.mxu0 0.0
  %118 = vmatmul.mubr.f32.gmra.mrb[0].mxu0 %v48
  %v119 = vpop.f32.mrb[0].mxu0
  %v120 = vadd.f32 %v29, %v119
  %v121 = vpop.f32.mrb[0].mxu0
  %v122 = vadd.f32 %v33, %v121
  %123 = vmatprep.mubr.f32.mxu0 0.0
  %124 = vmatmul.mubr.f32.gmra.mrb[0].mxu0 %v51
  %v125 = vpop.f32.mrb[0].mxu0
  %v126 = vadd.f32 %v29, %v125
  %v127 = vpop.f32.mrb[0].mxu0
  %v128 = vadd.f32 %v33, %v127
  %129 = vdwg.mxu0
  %130 = vmatprep.subr.mxu0 %v19
  %131 = vmatpush1.msra.mxu0 %v18
  %132 = vmatprep.subr.mxu0 %v23
  %133 = vmatpush1.msra.mxu0 %v22
  %134 = vmatprep.subr.mxu0 0.0
  %135 = vmatpush1.msra.mxu0 0.0
  %136 = vmatprep.subr.mxu0 0.0
  %137 = vmatpush1.msra.mxu0 0.0
  %138 = vmatprep.subr.mxu0 0.0
  %139 = vmatpush1.msra.mxu0 0.0
  %140 = vmatprep.subr.mxu0 0.0
  %141 = vmatpush1.msra.mxu0 0.0
  %142 = vmatprep.subr.mxu0 0.0
  %143 = vmatpush1.msra.mxu0 0.0
  %144 = vmatprep.subr.mxu0 0.0
  %145 = vmatpush1.msra.mxu0 0.0
  %146 = vmatprep.subr.mxu0 0.0
  %147 = vmatpush1.msra.mxu0 0.0
  %148 = vmatprep.subr.mxu0 0.0
  %149 = vmatpush1.msra.mxu0 0.0
  %150 = vmatprep.subr.mxu0 0.0
  %151 = vmatpush1.msra.mxu0 0.0
  %152 = vmatprep.subr.mxu0 0.0
  %153 = vmatpush1.msra.mxu0 0.0
  %154 = vmatprep.subr.mxu0 0.0
  %155 = vmatpush1.msra.mxu0 0.0
  %156 = vmatprep.subr.mxu0 0.0
  %157 = vmatpush1.msra.mxu0 0.0
  %158 = vmatprep.subr.mxu0 0.0
  %159 = vmatpush1.msra.mxu0 0.0
  %160 = vmatprep.subr.mxu0 0.0
  %161 = vmatpush1.msra.mxu0 0.0
  %162 = vmatprep.subr.mxu0 0.0
  %163 = vmatpush1.msra.mxu0 0.0
  %164 = vmatprep.subr.mxu0 0.0
  %165 = vmatpush1.msra.mxu0 0.0
  %166 = vmatprep.subr.mxu0 0.0
  %167 = vmatpush1.msra.mxu0 0.0
  %168 = vmatprep.subr.mxu0 0.0
  %169 = vmatpush1.msra.mxu0 0.0
  %170 = vmatprep.subr.mxu0 0.0
  %171 = vmatpush1.msra.mxu0 0.0
  %172 = vmatprep.subr.mxu0 0.0
  %173 = vmatpush1.msra.mxu0 0.0
  %174 = vmatprep.subr.mxu0 0.0
  %175 = vmatpush1.msra.mxu0 0.0
  %176 = vmatprep.subr.mxu0 0.0
  %177 = vmatpush1.msra.mxu0 0.0
  %178 = vmatprep.subr.mxu0 0.0
  %179 = vmatpush1.msra.mxu0 0.0
  %180 = vmatprep.subr.mxu0 0.0
  %181 = vmatpush1.msra.mxu0 0.0
  %182 = vmatprep.subr.mxu0 0.0
  %183 = vmatpush1.msra.mxu0 0.0
  %184 = vmatprep.subr.mxu0 0.0
  %185 = vmatpush1.msra.mxu0 0.0
  %186 = vmatprep.subr.mxu0 0.0
  %187 = vmatpush1.msra.mxu0 0.0
  %188 = vmatprep.subr.mxu0 0.0
  %189 = vmatpush1.msra.mxu0 0.0
  %190 = vmatprep.subr.mxu0 0.0
  %191 = vmatpush1.msra.mxu0 0.0
  %192 = vmatprep.subr.mxu0 0.0
  %193 = vmatpush1.msra.mxu0 0.0
  %194 = vmatprep.mubr.f32.mxu0 0.0
  %195 = vmatmul.mubr.f32.gmra.mrb[0].mxu0 %v48
  %v196 = vpop.f32.mrb[0].mxu0
  %v197 = vadd.f32 %v37, %v196
  %v198 = vpop.f32.mrb[0].mxu0
  %v199 = vadd.f32 %v41, %v198
  %200 = vmatprep.mubr.f32.mxu0 0.0
  %201 = vmatmul.mubr.f32.gmra.mrb[0].mxu0 %v51
  %v202 = vpop.f32.mrb[0].mxu0
  %v203 = vadd.f32 %v37, %v202
  %v204 = vpop.f32.mrb[0].mxu0
  %v205 = vadd.f32 %v41, %v204
  %206 = vdwg.mxu0
  %v207 = vmax.f32 %v120, 0.0
  %v208 = vmax.f32 %v122, 0.0
  %v209 = vmax.f32 %v197, 0.0
  %v210 = vmax.f32 %v199, 0.0
  %v211 = vmax.f32 %v126, 0.0
  %v212 = vmax.f32 %v128, 0.0
  %v213 = vmax.f32 %v203, 0.0
  %v214 = vmax.f32 %v205, 0.0
  %215 = vst [vmem:[%s3] sm:$0xff] %v207
  %216 = vst [vmem:[%s3 + $0x8] sm:$0xff] %v208
  %217 = vst [vmem:[%s3 + $0x10] sm:$0xff] %v209
  %218 = vst [vmem:[%s3 + $0x18] sm:$0xff] %v210
  %219 = vst [vmem:[%s3 + $0x20] sm:$0xff] %v211
  %220 = vst [vmem:[%s3 + $0x28] sm:$0xff] %v212
  %221 = vst [vmem:[%s3 + $0x30] sm:$0xff] %v213
  %222 = vst [vmem:[%s3 + $0x38] sm:$0xff] %v214
  // Predicated region
  $region14: #{local_gnn_forward.1} parent=0 // pred_check
    _
  $region15: #{local_gnn_forward.1} parent=0 // pred_check_branch
    %224 = sbr.rel (0) target = $region17
  $region16: #{local_gnn_forward.1} parent=0 // pred_region
    _
  $region17: #{local_gnn_forward.1} parent=0 // pred_fallthru
    _
  // Predicated region
  $region18: #{local_gnn_forward.1} parent=0 // pred_check
    _
  $region19: #{local_gnn_forward.1} parent=0 // pred_check_branch
    %226 = sbr.rel (0) target = $region21
  $region20: #{local_gnn_forward.1} parent=0 // pred_region
    _
  $region21: #{local_gnn_forward.1} parent=0 // pred_fallthru
    _

</llo_original>
